<compile_context>
chip_gen: v6e
topology: v6e:2x2x1
jax: 0.10.0
libtpu: 0.0.40
codegen_flags: <defaults>
</compile_context>

<pallas_src>
import functools

import jax
import jax.numpy as jnp
from jax.experimental import pallas as pl
from jax.experimental.pallas import tpu as pltpu


# --------------------------------------------------------------------------
# Single-pass kernel: whole (C, HW) feature map of one batch element resident.
# --------------------------------------------------------------------------
def _ca_fused_kernel(x_ref, w1_ref, w2_ref, o_ref):
    # x_ref / o_ref: (C, HW);  w1_ref: (Cr, C);  w2_ref: (C, Cr)
    x = x_ref[...]                                   # native dtype, no f32 block copy
    hw = x.shape[-1]

    # Spatial sum on the MXU (x @ ones) -> sublane-major (C, 1) f32 column; only
    # the max reduction uses the XLU.
    ones = jnp.ones((hw, 1), dtype=x.dtype)
    ssum = jnp.dot(x, ones, preferred_element_type=jnp.float32)        # (C, 1)
    avg = ssum * (1.0 / hw)
    mx = jnp.max(x, axis=-1, keepdims=True).astype(jnp.float32)        # (C, 1)

    # Fused shared MLP: both pooled vectors through the MXU together.
    stats = jnp.concatenate([avg, mx], axis=-1)                         # (C, 2)
    h = jnp.maximum(
        jnp.dot(w1_ref[...].astype(jnp.float32), stats,
                preferred_element_type=jnp.float32), 0.0)               # (Cr, 2)
    y = jnp.dot(w2_ref[...].astype(jnp.float32), h,
                preferred_element_type=jnp.float32)                     # (C, 2)
    att = jax.nn.sigmoid(y[:, 0:1] + y[:, 1:2])                         # (C, 1)

    # Pure lane-broadcast multiply in the native dtype (att is already sublane-major).
    o_ref[...] = x * att.astype(o_ref.dtype)


# --------------------------------------------------------------------------
# Two-pass tiled path: pass 1 = streaming (sum, max) reduction over lane tiles.
# --------------------------------------------------------------------------
def _ca_stats_kernel(x_ref, sum_ref, max_ref, *, hw_total, lane_tile, need_mask):
    # x_ref: (R, L) native dtype;  sum_ref / max_ref: (R, 1) f32, resident across
    # the lane-tile (reduction) grid axis.
    t = pl.program_id(1)
    x = x_ref[...]

    if need_mask:
        lane = jax.lax.broadcasted_iota(jnp.int32, x.shape, dimension=1)
        valid = (t * lane_tile + lane) < hw_total
        x_sum = jnp.where(valid, x, jnp.zeros_like(x))
        x_max = jnp.where(valid, x, jnp.full_like(x, -jnp.inf))
    else:
        x_sum = x
        x_max = x

    # Row-wise sum on the MXU (x @ ones), max on the XLU.
    ones = jnp.ones((x.shape[-1], 1), dtype=x.dtype)
    part_sum = jnp.dot(x_sum, ones, preferred_element_type=jnp.float32)      # (R, 1)
    part_max = jnp.max(x_max, axis=-1, keepdims=True).astype(jnp.float32)    # (R, 1)

    @pl.when(t == 0)
    def _():
        sum_ref[...] = jnp.zeros_like(sum_ref)
        max_ref[...] = jnp.full_like(max_ref, -jnp.inf)

    sum_ref[...] += part_sum
    max_ref[...] = jnp.maximum(max_ref[...], part_max)


def _ca_scale_kernel(x_ref, att_ref, o_ref):
    # x_ref / o_ref: (R, L) native dtype;  att_ref: (R, 1) native dtype.
    # Pure lane-broadcast multiply, no f32 block intermediate.
    o_ref[...] = x_ref[...] * att_ref[...]


# --------------------------------------------------------------------------
# Wrapper
# --------------------------------------------------------------------------
_HEADROOM = 4 << 20


def _vmem_capacity():
    try:
        cap = int(pltpu.get_tpu_info().vmem_capacity_bytes)
        if cap > 0:
            return cap
    except Exception:
        pass
    return 64 << 20  # conservative (v7x-sized) fallback


def _clamp_vmem(need, cap):
    lo = 8 << 20
    hi = max(lo, cap - (8 << 20))
    return int(min(max(need + _HEADROOM, lo), hi))


def _pick_lane_tile(budget_bytes, rows_tile, itemsize, hw, n_bufs):
    """Largest multiple-of-128 lane tile such that n_bufs blocks fit the budget."""
    hw_pad = pl.cdiv(hw, 128) * 128
    lanes = budget_bytes // max(1, n_bufs * rows_tile * itemsize)
    lanes = (lanes // 128) * 128
    lanes = max(128, lanes)
    return int(min(lanes, hw_pad, 4096))


def channel_attention(x_nchw, w1, w2, *, max_block_bytes=None):
    """x_nchw: (B, C, H, W); w1: (Cr, C); w2: (C, Cr) (PyTorch 1x1-conv weights,
    kernel dims squeezed).  Returns (B, C, H, W)."""
    B, C, H, W = x_nchw.shape
    Cr = w1.shape[0]
    HW = H * W
    itemsize = jnp.dtype(x_nchw.dtype).itemsize

    cap = _vmem_capacity()
    small_vmem = cap <= (64 << 20)          # v7x-class part (64 MiB per TC)
    if max_block_bytes is None:
        max_block_bytes = int((0.40 if small_vmem else 0.75) * cap)

    weight_bytes = (Cr * C + C * Cr) * jnp.dtype(w1.dtype).itemsize
    single_need = 4 * C * HW * itemsize     # 2x input block + 2x output block

    # v7x has 2 TensorCores and per-TC HBM bandwidth; with B == 1 the
    # grid=(B,) single-pass path feeds only one TC, so prefer the tiled path
    # (its "parallel" lane-tile axis gives both cores work).
    prefer_tiled = small_vmem and B == 1 and HW >= 2048

    if single_need <= max_block_bytes and not prefer_tiled:
        x = x_nchw.reshape(B, C, HW)
        out = pl.pallas_call(
            _ca_fused_kernel,
            out_shape=jax.ShapeDtypeStruct((B, C, HW), x.dtype),
            grid_spec=pltpu.PrefetchScalarGridSpec(
                num_scalar_prefetch=0,
                grid=(B,),
                in_specs=[
                    pl.BlockSpec((pl.Squeezed(), C, HW), lambda b: (b, 0, 0)),
                    pl.BlockSpec((Cr, C), lambda b: (0, 0)),
                    pl.BlockSpec((C, Cr), lambda b: (0, 0)),
                ],
                out_specs=pl.BlockSpec((pl.Squeezed(), C, HW), lambda b: (b, 0, 0)),
            ),
            compiler_params=pltpu.CompilerParams(
                dimension_semantics=("parallel",),
                vmem_limit_bytes=_clamp_vmem(single_need + 4 * weight_bytes, cap)),
        )(x, w1, w2)
        return out.reshape(B, C, H, W)

    # ---- two-pass tiled path: flatten (B, C, HW) -> (B*C, HW) for dense blocks ----
    rows = B * C
    x2d = x_nchw.reshape(rows, HW)

    row_tile = rows if rows <= 256 else 256      # full dim, or multiple of 8
    n_r = pl.cdiv(rows, row_tile)

    # Pass-1 budget: input is the only block-sized double-buffered array.
    l1 = _pick_lane_tile(max_block_bytes, row_tile, itemsize, HW, n_bufs=2)
    n_t1 = pl.cdiv(HW, l1)
    need_mask = (HW % l1) != 0

    stats_kernel = functools.partial(
        _ca_stats_kernel, hw_total=HW, lane_tile=l1, need_mask=need_mask)
    sums, maxs = pl.pallas_call(
        stats_kernel,
        out_shape=(jax.ShapeDtypeStruct((rows, 1), jnp.float32),
                   jax.ShapeDtypeStruct((rows, 1), jnp.float32)),
        grid_spec=pltpu.PrefetchScalarGridSpec(
            num_scalar_prefetch=0,
            grid=(n_r, n_t1),
            in_specs=[pl.BlockSpec((row_tile, l1), lambda r, t: (r, t))],
            out_specs=[pl.BlockSpec((row_tile, 1), lambda r, t: (r, 0)),
                       pl.BlockSpec((row_tile, 1), lambda r, t: (r, 0))],
        ),
        compiler_params=pltpu.CompilerParams(
            dimension_semantics=("parallel", "arbitrary"),
            vmem_limit_bytes=_clamp_vmem(
                2 * row_tile * l1 * itemsize + 4 * row_tile * 4, cap)),
    )(x2d)

    # Tiny shared MLP + sigmoid in plain JAX (negligible work for XLA).
    avg = (sums * (1.0 / HW)).reshape(B, C)
    mx = maxs.reshape(B, C)
    w1f = w1.astype(jnp.float32)
    w2f = w2.astype(jnp.float32)

    def mlp(v):
        return jnp.maximum(v @ w1f.T, 0.0) @ w2f.T

    att = jax.nn.sigmoid(mlp(avg) + mlp(mx)).astype(x_nchw.dtype).reshape(rows, 1)

    # Pass 2: lane-broadcast rescale; both grid axes parallel (megacore even at B=1).
    l2 = _pick_lane_tile(max_block_bytes, row_tile, itemsize, HW, n_bufs=4)
    n_t2 = pl.cdiv(HW, l2)
    out2d = pl.pallas_call(
        _ca_scale_kernel,
        out_shape=jax.ShapeDtypeStruct((rows, HW), x_nchw.dtype),
        grid_spec=pltpu.PrefetchScalarGridSpec(
            num_scalar_prefetch=0,
            grid=(n_r, n_t2),
            in_specs=[pl.BlockSpec((row_tile, l2), lambda r, t: (r, t)),
                      pl.BlockSpec((row_tile, 1), lambda r, t: (r, 0))],
            out_specs=pl.BlockSpec((row_tile, l2), lambda r, t: (r, t)),
        ),
        compiler_params=pltpu.CompilerParams(
            dimension_semantics=("parallel", "parallel"),
            vmem_limit_bytes=_clamp_vmem(
                4 * row_tile * l2 * itemsize + 2 * row_tile * itemsize, cap)),
    )(x2d, att)
    return out2d.reshape(B, C, H, W)


# --------------------------------------------------------------------------
# Pure-JAX reference (matches the PyTorch module).
# --------------------------------------------------------------------------
def reference(x, w1, w2):
    avg = jnp.mean(x, axis=(2, 3))                   # (B, C)
    mx = jnp.max(x, axis=(2, 3))                     # (B, C)

    def mlp(v):
        h = jnp.maximum(v @ w1.T, 0.0)
        return h @ w2.T

    att = jax.nn.sigmoid(mlp(avg) + mlp(mx))         # (B, C)
    return x * att[:, :, None, None]


if __name__ == "__main__":
    # Shapes consistent with the module: channel divisible by reduction_ratio.
    B, C, H, W = 2, 32, 16, 16
    reduction_ratio = 4
    Cr = C // reduction_ratio

    key = jax.random.PRNGKey(0)
    kx, k1, k2 = jax.random.split(key, 3)
    x = jax.random.normal(kx, (B, C, H, W), dtype=jnp.float32)
    # Shared-MLP weights (1x1 convs, no bias; kernel dims squeezed).
    w1 = jax.random.normal(k1, (Cr, C), dtype=jnp.float32) * 0.1
    w2 = jax.random.normal(k2, (C, Cr), dtype=jnp.float32) * 0.1

    ref = reference(x, w1, w2)

    # 1) Single-pass (whole feature map resident) path.
    out = jax.block_until_ready(channel_attention(x, w1, w2))
    assert out.shape == (B, C, H, W)
    assert jnp.allclose(out, ref, atol=1e-5, rtol=1e-5), "single-pass mismatch"

    # 2) Two-pass tiled path (forced with a tiny block budget).
    out2 = jax.block_until_ready(
        channel_attention(x, w1, w2, max_block_bytes=64 << 10))
    assert jnp.allclose(out2, ref, atol=1e-5, rtol=1e-5), "two-pass mismatch"

    # 3) Two-pass tiled path with a masked last lane tile (HW % 128 != 0).
    xm = jax.random.normal(kx, (1, C, 10, 10), dtype=jnp.float32)
    refm = reference(xm, w1, w2)
    out3 = jax.block_until_ready(
        channel_attention(xm, w1, w2, max_block_bytes=16 << 10))
    assert jnp.allclose(out3, refm, atol=1e-5, rtol=1e-5), "masked tiled mismatch"

    # 4) bf16 input exercises the native-dtype (no f32 block copy) path.
    xb = x.astype(jnp.bfloat16)
    refb = reference(xb.astype(jnp.float32), w1, w2)
    out4 = jax.block_until_ready(channel_attention(xb, w1, w2))
    assert float(jnp.max(jnp.abs(out4.astype(jnp.float32) - refb))) < 0.1, \
        "bf16 mismatch"

    print("KERNEL_OK")
</pallas_src>

<mosaic_0001>
module attributes {stable_mosaic.version = 11 : i64} {
  func.func @_ca_fused_kernel(%arg0: i32, %arg1: memref<1x32x256xf32, #tpu.memory_space<vmem>>, %arg2: memref<8x32xf32, #tpu.memory_space<vmem>>, %arg3: memref<32x8xf32, #tpu.memory_space<vmem>>, %arg4: memref<1x32x256xf32, #tpu.memory_space<vmem>>) attributes {dimension_semantics = [#tpu.dimension_semantics<parallel>], iteration_bounds = array<i64: 2>, scalar_prefetch = 0 : i64, scratch_operands = 0 : i64, tpu.core_type = #tpu.core_type<tc>, window_params = [{transform_indices = @transform_0, window_bounds = array<i64: 1, 32, 256>}, {pipeline_mode = #tpu.pipeline_mode<synchronous>, transform_indices = @transform_1, window_bounds = array<i64: 8, 32>}, {pipeline_mode = #tpu.pipeline_mode<synchronous>, transform_indices = @transform_2, window_bounds = array<i64: 32, 8>}, {transform_indices = @transform_3, window_bounds = array<i64: 1, 32, 256>}]} {
    %c0 = arith.constant 0 : index
    %c0_0 = arith.constant 0 : index
    %c0_1 = arith.constant 0 : index
    %0 = vector.load %arg1[%c0, %c0_0, %c0_1] : memref<1x32x256xf32, #tpu.memory_space<vmem>>, vector<1x32x256xf32>
    %1 = vector.shape_cast %0 : vector<1x32x256xf32> to vector<32x256xf32>
    %cst = arith.constant 1.000000e+00 : f32
    %2 = vector.broadcast %cst : f32 to vector<256x1xf32>
    %cst_2 = arith.constant dense<0.000000e+00> : vector<32x1xf32>
    %3 = tpu.matmul %1, %2, %cst_2 {dimension_numbers = #tpu.dot_dimension_numbers<[1], [0], [0], [1], [0, 0, 1, 1], [], []>} : vector<32x256xf32>, vector<256x1xf32>, vector<32x1xf32> -> vector<32x1xf32>
    %cst_3 = arith.constant 3.906250e-03 : f32
    %4 = vector.broadcast %cst_3 : f32 to vector<32x1xf32>
    %5 = arith.mulf %3, %4 : vector<32x1xf32>
    %cst_4 = arith.constant dense<0xFF800000> : vector<32xf32>
    %6 = vector.multi_reduction <maximumf>, %1, %cst_4 [1] : vector<32x256xf32> to vector<32xf32>
    %7 = vector.shape_cast %6 : vector<32xf32> to vector<32x1xf32>
    %8 = tpu.concatenate %5, %7 in 1 : vector<32x1xf32>, vector<32x1xf32> -> vector<32x2xf32>
    %c0_5 = arith.constant 0 : index
    %c0_6 = arith.constant 0 : index
    %9 = vector.load %arg2[%c0_5, %c0_6] : memref<8x32xf32, #tpu.memory_space<vmem>>, vector<8x32xf32>
    %cst_7 = arith.constant dense<0.000000e+00> : vector<8x2xf32>
    %10 = tpu.matmul %9, %8, %cst_7 {dimension_numbers = #tpu.dot_dimension_numbers<[1], [0], [0], [1], [0, 0, 1, 1], [], []>} : vector<8x32xf32>, vector<32x2xf32>, vector<8x2xf32> -> vector<8x2xf32>
    %cst_8 = arith.constant 0.000000e+00 : f32
    %11 = vector.broadcast %cst_8 : f32 to vector<8x2xf32>
    %12 = arith.maximumf %10, %11 : vector<8x2xf32>
    %c0_9 = arith.constant 0 : index
    %c0_10 = arith.constant 0 : index
    %13 = vector.load %arg3[%c0_9, %c0_10] : memref<32x8xf32, #tpu.memory_space<vmem>>, vector<32x8xf32>
    %cst_11 = arith.constant dense<0.000000e+00> : vector<32x2xf32>
    %14 = tpu.matmul %13, %12, %cst_11 {dimension_numbers = #tpu.dot_dimension_numbers<[1], [0], [0], [1], [0, 0, 1, 1], [], []>} : vector<32x8xf32>, vector<8x2xf32>, vector<32x2xf32> -> vector<32x2xf32>
    %15 = vector.extract_strided_slice %14 {offsets = [0, 0], sizes = [32, 1], strides = [1, 1]} : vector<32x2xf32> to vector<32x1xf32>
    %16 = vector.extract_strided_slice %14 {offsets = [0, 1], sizes = [32, 1], strides = [1, 1]} : vector<32x2xf32> to vector<32x1xf32>
    %17 = arith.addf %15, %16 : vector<32x1xf32>
    %18 = arith.negf %17 : vector<32x1xf32>
    %19 = math.exp %18 : vector<32x1xf32>
    %cst_12 = arith.constant 1.000000e+00 : f32
    %20 = vector.broadcast %cst_12 : f32 to vector<32x1xf32>
    %21 = arith.addf %20, %19 : vector<32x1xf32>
    %22 = arith.divf %20, %21 : vector<32x1xf32>
    %23 = vector.broadcast %22 : vector<32x1xf32> to vector<32x256xf32>
    %24 = arith.mulf %1, %23 : vector<32x256xf32>
    %c0_13 = arith.constant 0 : index
    %c0_14 = arith.constant 0 : index
    %c0_15 = arith.constant 0 : index
    %25 = vector.load %arg4[%c0_13, %c0_14, %c0_15] : memref<1x32x256xf32, #tpu.memory_space<vmem>>, vector<1x32x256xf32>
    %26 = vector.shape_cast %25 : vector<1x32x256xf32> to vector<32x256xf32>
    %27 = vector.shape_cast %24 : vector<32x256xf32> to vector<1x32x256xf32>
    tpu.vector_store %arg4[%c0_13, %c0_14, %c0_15], %27 {strides = array<i32>} : memref<1x32x256xf32, #tpu.memory_space<vmem>>, vector<1x32x256xf32>,
    return
  }
  func.func @transform_0(%arg0: i32) -> (i32, i32, i32) {
    %c0_i32 = arith.constant 0 : i32
    %c0_i32_0 = arith.constant 0 : i32
    %c0_i32_1 = arith.constant 0 : i32
    return %arg0, %c0_i32, %c0_i32_0 : i32, i32, i32
  }
  func.func @transform_1(%arg0: i32) -> (i32, i32) {
    %c0_i32 = arith.constant 0 : i32
    %c0_i32_0 = arith.constant 0 : i32
    %c0_i32_1 = arith.constant 0 : i32
    return %c0_i32, %c0_i32_0 : i32, i32
  }
  func.func @transform_2(%arg0: i32) -> (i32, i32) {
    %c0_i32 = arith.constant 0 : i32
    %c0_i32_0 = arith.constant 0 : i32
    %c0_i32_1 = arith.constant 0 : i32
    return %c0_i32, %c0_i32_0 : i32, i32
  }
  func.func @transform_3(%arg0: i32) -> (i32, i32, i32) {
    %c0_i32 = arith.constant 0 : i32
    %c0_i32_0 = arith.constant 0 : i32
    %c0_i32_1 = arith.constant 0 : i32
    return %arg0, %c0_i32, %c0_i32_0 : i32, i32, i32
  }
}

</mosaic_0001>

<llo_original>
// kernel: tpu_custom_call.1
$region0: #{tpu_custom_call.1}
  #allocation0 [shape = 'u32[]', space=smem, size = 0x4, offset = 0x4, fixed_abs, tag = 'smem constant byte address 0x4 - core index']
  #allocation1 [shape = 'u32[144,128]{1,0:T(1,128)}', space=vmem, size = 0x12000, scoped, tag = 'internal scratch']
  %s0 = inlined_call_operand.hbm [shape: f32[2,32,256], index: 0, kind: input, shape index: {}]
  %s1 = inlined_call_operand.vmem [shape: f32[8,32], index: 1, kind: input, shape index: {}]
  %s2 = inlined_call_operand.vmem [shape: f32[32,8], index: 2, kind: input, shape index: {}]
  %s3 = inlined_call_operand.hbm [shape: f32[2,32,256], index: 3, kind: output, shape index: {}]
  %s4 = sld [smem:[#allocation0]]
  $region49: #{tpu_custom_call.1} parent=0
    _
  %s6 = ssub.s32 1, %s4
  %s7 = scalar_select 0, %s6, %s4
  $region1: #{tpu_custom_call.1} parent=0
    #allocation2 [shape = 'u8[65536]{0}', space=vmem, size = 0x10000, scoped, tag = 'input window, operand 0']
    #allocation3 [shape = 's32[2]{0}', space=sflag, size = 0x8, scoped, tag = 'scoped memory for tpu_custom_call.1']
    #allocation4 [shape = 's32[2]{0}', space=sflag, size = 0x8, scoped, tag = 'scoped memory for tpu_custom_call.1']
    #allocation5 [shape = 'u8[65536]{0}', space=vmem, size = 0x10000, scoped, tag = 'output window, operand 0']
    %8 = vsyncpa [#allocation3], 0
    %s9 = scalar_lea.sflag [#allocation3], 1
    %10 = vsyncpa %s9, 0
    %11 = vsyncpa [#allocation4], 0
    %s12 = scalar_lea.sflag [#allocation4], 1
    %13 = vsyncpa %s12, 0
    loop: start=0, step=1, limit=4
    $region2: #{tpu_custom_call.1} parent=1 // loop_pre_header
      _
    $region3: #{tpu_custom_call.1} parent=1 // loop_header
      %s15 = sphi 0, %s19
      %p16 = scmp.ge.s32.totalorder %s15, 4
      %s25 = sphi 0, %s27
      %s28 = sphi 0, %s25
      %s29 = sphi 0, %s28
      %s45 = sphi 0, %s29
      %s49 = sphi 0, %s49
      %s51 = sphi 0, %s49
      %s52 = sphi 0, %s51
      %s66 = sphi 0, %s52
      %s70 = sphi 0, %s70
      %s72 = sphi 0, %s70
      %s73 = sphi 0, %s72
      %s87 = sphi 0, %s73
      %s93 = sphi 0, %s95
      %s96 = sphi 0, %s93
      %s97 = sphi 0, %s96
      %s113 = sphi 0, %s97
    $region4: #{tpu_custom_call.1} parent=1 // loop_header_branch
      %18 = sbr.rel (%p16) target = $region8
    $region5: #{tpu_custom_call.1} parent=1 // loop_body
      %s20 = ssub.s32 %s15, 1
      %s21 = ssub.s32 %s15, 2
      %s22 = sadd.s32 %s15, 1
      %s23 = ssub.s32 %s15, %s22
      %p24 = scmp.eq.s32.totalorder %s23, 0
      %s26 = sadd.s32 %s25, 1
      %s27 = scalar_select %p24, %s25, %s26
      %p30 = pneg %p24
      %p31 = scmp.eq.s32.totalorder %s15, 1
      %p32 = por %p30, %p31
      %p33 = scmp.ne.s32.totalorder %s25, %s28
      %p34 = scmp.eq.s32.totalorder %s15, 0
      %p35 = por %p33, %p34
      %p36 = scmp.ne.s32.totalorder %s25, %s28
      %p37 = scmp.eq.s32.totalorder %s20, 1
      %p38 = por %p36, %p37
      %p39 = scmp.ne.s32.totalorder %s28, %s29
      %p40 = scmp.eq.s32.totalorder %s20, 0
      %p41 = por %p39, %p40
      %p42 = scmp.ne.s32.totalorder %s28, %s29
      %p43 = scmp.eq.s32.totalorder %s21, 1
      %p44 = por %p42, %p43
      %p46 = scmp.ne.s32.totalorder %s29, %s45
      %p47 = scmp.eq.s32.totalorder %s21, 0
      %p48 = por %p46, %p47
      %s50 = sadd.s32 %s49, 1
      %p53 = scmp.eq.s32.totalorder %s15, 1
      %p54 = scmp.ne.s32.totalorder %s49, %s51
      %p55 = scmp.eq.s32.totalorder %s15, 0
      %p56 = por %p54, %p55
      %p57 = scmp.ne.s32.totalorder %s49, %s51
      %p58 = scmp.eq.s32.totalorder %s20, 1
      %p59 = por %p57, %p58
      %p60 = scmp.ne.s32.totalorder %s51, %s52
      %p61 = scmp.eq.s32.totalorder %s20, 0
      %p62 = por %p60, %p61
      %p63 = scmp.ne.s32.totalorder %s51, %s52
      %p64 = scmp.eq.s32.totalorder %s21, 1
      %p65 = por %p63, %p64
      %p67 = scmp.ne.s32.totalorder %s52, %s66
      %p68 = scmp.eq.s32.totalorder %s21, 0
      %p69 = por %p67, %p68
      %s71 = sadd.s32 %s70, 1
      %p74 = scmp.eq.s32.totalorder %s15, 1
      %p75 = scmp.ne.s32.totalorder %s70, %s72
      %p76 = scmp.eq.s32.totalorder %s15, 0
      %p77 = por %p75, %p76
      %p78 = scmp.ne.s32.totalorder %s70, %s72
      %p79 = scmp.eq.s32.totalorder %s20, 1
      %p80 = por %p78, %p79
      %p81 = scmp.ne.s32.totalorder %s72, %s73
      %p82 = scmp.eq.s32.totalorder %s20, 0
      %p83 = por %p81, %p82
      %p84 = scmp.ne.s32.totalorder %s72, %s73
      %p85 = scmp.eq.s32.totalorder %s21, 1
      %p86 = por %p84, %p85
      %p88 = scmp.ne.s32.totalorder %s73, %s87
      %p89 = scmp.eq.s32.totalorder %s21, 0
      %p90 = por %p88, %p89
      %s91 = ssub.s32 %s15, %s22
      %p92 = scmp.eq.s32.totalorder %s91, 0
      %s94 = sadd.s32 %s93, 1
      %s95 = scalar_select %p92, %s93, %s94
      %p98 = pneg %p92
      %p99 = scmp.eq.s32.totalorder %s15, 1
      %p100 = por %p98, %p99
      %p101 = scmp.ne.s32.totalorder %s93, %s96
      %p102 = scmp.eq.s32.totalorder %s15, 0
      %p103 = por %p101, %p102
      %p104 = scmp.ne.s32.totalorder %s93, %s96
      %p105 = scmp.eq.s32.totalorder %s20, 1
      %p106 = por %p104, %p105
      %p107 = scmp.ne.s32.totalorder %s96, %s97
      %p108 = scmp.eq.s32.totalorder %s20, 0
      %p109 = por %p107, %p108
      %p110 = scmp.ne.s32.totalorder %s96, %s97
      %p111 = scmp.eq.s32.totalorder %s21, 1
      %p112 = por %p110, %p111
      %p114 = scmp.ne.s32.totalorder %s97, %s113
      %p115 = scmp.eq.s32.totalorder %s21, 0
      %p116 = por %p114, %p115
      %p117 = scmp.le.s32.totalorder 1, %s15
      %p118 = scmp.lt.s32.totalorder %s15, 3
      %p119 = pnand %p117, %p118
      %p120 = pneg %p119
      // Predicated region
      $region9: #{tpu_custom_call.1} parent=5 // pred_check
        _
      $region10: #{tpu_custom_call.1} parent=5 // pred_check_branch
        %122 = sbr.rel (%p119) target = $region12
      $region11: #{tpu_custom_call.1} parent=5 // pred_region
        %s123 = ssub.s32 %s15, 1
        // Predicated region
        $region13: #{tpu_custom_call.1} parent=11 // pred_check
          %p124 = pneg %p62
        $region14: #{tpu_custom_call.1} parent=11 // pred_check_branch
          %126 = sbr.rel (%p124) target = $region16
        $region15: #{tpu_custom_call.1} parent=11 // pred_region
          _
        $region16: #{tpu_custom_call.1} parent=11 // pred_fallthru
          _
        // Predicated region
        $region17: #{tpu_custom_call.1} parent=11 // pred_check
          %p127 = pneg %p83
        $region18: #{tpu_custom_call.1} parent=11 // pred_check_branch
          %129 = sbr.rel (%p127) target = $region20
        $region19: #{tpu_custom_call.1} parent=11 // pred_region
          _
        $region20: #{tpu_custom_call.1} parent=11 // pred_fallthru
          _
      $region12: #{tpu_custom_call.1} parent=5 // pred_fallthru
        _
      %p130 = scmp.lt.s32.totalorder %s15, 2
      // Predicated region
      $region21: #{tpu_custom_call.1} parent=5 // pred_check
        %p131 = pneg %p130
      $region22: #{tpu_custom_call.1} parent=5 // pred_check_branch
        %133 = sbr.rel (%p131) target = $region24
      $region23: #{tpu_custom_call.1} parent=5 // pred_region
        // Predicated region
        $region25: #{tpu_custom_call.1} parent=23 // pred_check
          %p134 = pneg %p35
        $region26: #{tpu_custom_call.1} parent=23 // pred_check_branch
          %136 = sbr.rel (%p134) target = $region28
        $region27: #{tpu_custom_call.1} parent=23 // pred_region
          %s137 = sand.u32 %s25, 1
          %s138 = scalar_lea.sflag [#allocation3], %s137
          %s139 = sand.u32 %s25, 1
          %s140 = smul.addr %s139, 64
          %s141 = scalar_lea.vmem [#allocation2], %s140
          %s143 = ssub.s32 1024, 1024
          %144 = vsyncadd %s138, %s143
          %s145 = smul.addr %s15, 8
          %s146 = smul.addr %s145, 128
          %s147 = scalar_lea.hbm %s0, %s146
          %s148 = sshll.u32 %s141, 4
          %s149 = int_to_ptr.vmem [resolvable:$true] %s148
          %154 = dma.hbm_to_vmem [thread:$0]  %s147, 1024, %s149, %s138, 256, 256, 16
        $region28: #{tpu_custom_call.1} parent=23 // pred_fallthru
          _
      $region24: #{tpu_custom_call.1} parent=5 // pred_fallthru
        _
      %p155 = scmp.le.s32.totalorder 1, %s15
      %p156 = scmp.lt.s32.totalorder %s15, 3
      %p157 = pnand %p155, %p156
      %p158 = pneg %p157
      // Predicated region
      $region29: #{tpu_custom_call.1} parent=5 // pred_check
        _
      $region30: #{tpu_custom_call.1} parent=5 // pred_check_branch
        %160 = sbr.rel (%p157) target = $region32
      $region31: #{tpu_custom_call.1} parent=5 // pred_region
        %s161 = ssub.s32 %s15, 1
        %s162 = sand.u32 %s28, 1
        %s163 = scalar_lea.sflag [#allocation3], %s162
        %s164 = sand.u32 %s28, 1
        %s165 = smul.addr %s164, 64
        %s166 = scalar_lea.vmem [#allocation2], %s165
        // Predicated region
        $region33: #{tpu_custom_call.1} parent=31 // pred_check
          %p167 = pneg %p41
        $region34: #{tpu_custom_call.1} parent=31 // pred_check_branch
          %169 = sbr.rel (%p167) target = $region36
        $region35: #{tpu_custom_call.1} parent=31 // pred_region
          %170 = dma.done %s163, 1024
        $region36: #{tpu_custom_call.1} parent=31 // pred_fallthru
          _
        %s171 = sand.u32 %s28, 1
        %s172 = scalar_lea.sflag [#allocation3], %s171
        %s173 = sand.u32 %s28, 1
        %s174 = smul.addr %s173, 64
        %s175 = scalar_lea.vmem [#allocation2], %s174
        %p176 = pneg %p41
        %p177 = pneg %p38
        %p178 = pneg %p62
        %p179 = pneg %p59
        %p180 = pneg %p83
        %p181 = pneg %p80
        %p182 = pneg %p109
        %p183 = pneg %p106
        %s184 = sand.u32 %s96, 1
        %s185 = scalar_lea.sflag [#allocation4], %s184
        %s186 = sand.u32 %s96, 1
        %s187 = smul.addr %s186, 64
        %s188 = scalar_lea.vmem [#allocation5], %s187
        %v189 = vld [vmem:[%s166] sm:$0xff]
        %v190 = vld [vmem:[%s166 + $0x8] sm:$0xff]
        %v191 = vld [vmem:[%s166 + $0x10] sm:$0xff]
        %v192 = vld [vmem:[%s166 + $0x18] sm:$0xff]
        %v193 = vld [vmem:[%s166 + $0x20] sm:$0xff]
        %v194 = vld [vmem:[%s166 + $0x28] sm:$0xff]
        %v195 = vld [vmem:[%s166 + $0x30] sm:$0xff]
        %v196 = vld [vmem:[%s166 + $0x38] sm:$0xff]
        %197 = vmatprep.subr.mxu0 0.0
        %198 = vmatpush1.msra.mxu0 1.0
        %199 = vmatprep.subr.mxu0 0.0
        %200 = vmatpush1.msra.mxu0 1.0
        %201 = vmatprep.subr.mxu0 0.0
        %202 = vmatpush1.msra.mxu0 1.0
        %203 = vmatprep.subr.mxu0 0.0
        %204 = vmatpush1.msra.mxu0 1.0
        %205 = vmatprep.subr.mxu0 0.0
        %206 = vmatpush1.msra.mxu0 1.0
        %207 = vmatprep.subr.mxu0 0.0
        %208 = vmatpush1.msra.mxu0 1.0
        %209 = vmatprep.subr.mxu0 0.0
        %210 = vmatpush1.msra.mxu0 1.0
        %211 = vmatprep.subr.mxu0 0.0
        %212 = vmatpush1.msra.mxu0 1.0
        %213 = vmatprep.subr.mxu0 0.0
        %214 = vmatpush1.msra.mxu0 1.0
        %215 = vmatprep.subr.mxu0 0.0
        %216 = vmatpush1.msra.mxu0 1.0
        %217 = vmatprep.subr.mxu0 0.0
        %218 = vmatpush1.msra.mxu0 1.0
        %219 = vmatprep.subr.mxu0 0.0
        %220 = vmatpush1.msra.mxu0 1.0
        %221 = vmatprep.subr.mxu0 0.0
        %222 = vmatpush1.msra.mxu0 1.0
        %223 = vmatprep.subr.mxu0 0.0
        %224 = vmatpush1.msra.mxu0 1.0
        %225 = vmatprep.subr.mxu0 0.0
        %226 = vmatpush1.msra.mxu0 1.0
        %227 = vmatprep.subr.mxu0 0.0
        %228 = vmatpush1.msra.mxu0 1.0
        %229 = vmatprep.subr.mxu0 0.0
        %230 = vmatpush2.msra.mxu0 1.0
        %231 = vmatprep.subr.mxu0 0.0
        %232 = vmatpush2.msra.mxu0 1.0
        %233 = vmatprep.subr.mxu0 0.0
        %234 = vmatpush2.msra.mxu0 1.0
        %235 = vmatprep.subr.mxu0 0.0
        %236 = vmatpush2.msra.mxu0 1.0
        %237 = vmatprep.subr.mxu0 0.0
        %238 = vmatpush2.msra.mxu0 1.0
        %239 = vmatprep.subr.mxu0 0.0
        %240 = vmatpush2.msra.mxu0 1.0
        %241 = vmatprep.subr.mxu0 0.0
        %242 = vmatpush2.msra.mxu0 1.0
        %243 = vmatprep.subr.mxu0 0.0
        %244 = vmatpush2.msra.mxu0 1.0
        %245 = vmatprep.subr.mxu0 0.0
        %246 = vmatpush2.msra.mxu0 1.0
        %247 = vmatprep.subr.mxu0 0.0
        %248 = vmatpush2.msra.mxu0 1.0
        %249 = vmatprep.subr.mxu0 0.0
        %250 = vmatpush2.msra.mxu0 1.0
        %251 = vmatprep.subr.mxu0 0.0
        %252 = vmatpush2.msra.mxu0 1.0
        %253 = vmatprep.subr.mxu0 0.0
        %254 = vmatpush2.msra.mxu0 1.0
        %255 = vmatprep.subr.mxu0 0.0
        %256 = vmatpush2.msra.mxu0 1.0
        %257 = vmatprep.subr.mxu0 0.0
        %258 = vmatpush2.msra.mxu0 1.0
        %259 = vmatprep.subr.mxu0 0.0
        %260 = vmatpush2.msra.mxu0 1.0
        %261 = vmatprep.mubr.f32.mxu0 %v190
        %262 = vmatmul.mubr.f32.gmra.mxu0 %v189
        %v263 = vpop.f32.mrf.mxu0
        %v264 = vadd.f32 0.0, %v263
        %v265 = vpop.f32.mrf.mxu0
        %266 = vmatprep.mubr.f32.mxu0 %v192
        %267 = vmatmul.mubr.f32.gmra.mxu0 %v191
        %v268 = vpop.f32.mrf.mxu0
        %v269 = vadd.f32 0.0, %v268
        %v270 = vpop.f32.mrf.mxu0
        %271 = vmatprep.mubr.f32.mxu0 %v194
        %272 = vmatmul.mubr.f32.gmra.mxu0 %v193
        %v273 = vpop.f32.mrf.mxu0
        %v274 = vadd.f32 0.0, %v273
        %v275 = vpop.f32.mrf.mxu0
        %276 = vmatprep.mubr.f32.mxu0 %v196
        %277 = vmatmul.mubr.f32.gmra.mxu0 %v195
        %v278 = vpop.f32.mrf.mxu0
        %v279 = vadd.f32 0.0, %v278
        %v280 = vpop.f32.mrf.mxu0
        %281 = vdwg.mxu0
        %v282 = vmul.f32 %v264, 0.00390625
        %v283 = vmul.f32 %v269, 0.00390625
        %v284 = vmul.f32 %v274, 0.00390625
        %v285 = vmul.f32 %v279, 0.00390625
        %v286 = vmax.f32 %v189, %v190
        %287 = vmax.xlane.f32.xlu0 %v286
        %v288 = vpop.xlane.xlu0 %287
        %v289 = vmax.f32 %v191, %v192
        %290 = vmax.xlane.f32.xlu0 %v289
        %v291 = vpop.xlane.xlu0 %290
        %v292 = vmax.f32 %v193, %v194
        %293 = vmax.xlane.f32.xlu0 %v292
        %v294 = vpop.xlane.xlu0 %293
        %v295 = vmax.f32 %v195, %v196
        %296 = vmax.xlane.f32.xlu0 %v295
        %v297 = vpop.xlane.xlu0 %296
        %vm298 = vcmask 7168
        %v299 = vsel %vm298, %v282, %v288
        %v300 = vsel %vm298, %v283, %v291
        %v301 = vsel %vm298, %v284, %v294
        %v302 = vsel %vm298, %v285, %v297
        %v303 = vld [vmem:[%s1] sm:$0xff]
        %vm304 = vcmask 261120
        %v306 = vsel %vm304, %v303, 0
        %308 = vmatprep.subr.mxu0 0.0
        %309 = vmatpush1.msra.mxu0 0.0
        %310 = vmatprep.subr.mxu0 0.0
        %311 = vmatpush1.msra.mxu0 0.0
        %312 = vmatprep.subr.mxu0 0.0
        %313 = vmatpush1.msra.mxu0 0.0
        %314 = vmatprep.subr.mxu0 0.0
        %315 = vmatpush1.msra.mxu0 0.0
        %316 = vmatprep.subr.mxu0 0.0
        %317 = vmatpush1.msra.mxu0 0.0
        %318 = vmatprep.subr.mxu0 0.0
        %319 = vmatpush1.msra.mxu0 0.0
        %320 = vmatprep.subr.mxu0 0.0
        %321 = vmatpush1.msra.mxu0 0.0
        %322 = vmatprep.subr.mxu0 0.0
        %323 = vmatpush1.msra.mxu0 0.0
        %324 = vmatprep.subr.mxu0 0.0
        %325 = vmatpush1.msra.mxu0 0.0
        %326 = vmatprep.subr.mxu0 0.0
        %327 = vmatpush1.msra.mxu0 0.0
        %328 = vmatprep.subr.mxu0 0.0
        %329 = vmatpush1.msra.mxu0 0.0
        %330 = vmatprep.subr.mxu0 0.0
        %331 = vmatpush1.msra.mxu0 0.0
        %332 = vmatprep.subr.mxu0 0.0
        %333 = vmatpush1.msra.mxu0 %v302
        %334 = vmatprep.subr.mxu0 0.0
        %335 = vmatpush1.msra.mxu0 %v301
        %336 = vmatprep.subr.mxu0 0.0
        %337 = vmatpush1.msra.mxu0 %v300
        %338 = vmatprep.subr.mxu0 0.0
        %339 = vmatpush1.msra.mxu0 %v299
        %340 = vmatprep.subr.mxu0 0.0
        %341 = vmatpush2.msra.mxu0 0.0
        %342 = vmatprep.subr.mxu0 0.0
        %343 = vmatpush2.msra.mxu0 0.0
        %344 = vmatprep.subr.mxu0 0.0
        %345 = vmatpush2.msra.mxu0 0.0
        %346 = vmatprep.subr.mxu0 0.0
        %347 = vmatpush2.msra.mxu0 0.0
        %348 = vmatprep.subr.mxu0 0.0
        %349 = vmatpush2.msra.mxu0 0.0
        %350 = vmatprep.subr.mxu0 0.0
        %351 = vmatpush2.msra.mxu0 0.0
        %352 = vmatprep.subr.mxu0 0.0
        %353 = vmatpush2.msra.mxu0 0.0
        %354 = vmatprep.subr.mxu0 0.0
        %355 = vmatpush2.msra.mxu0 0.0
        %356 = vmatprep.subr.mxu0 0.0
        %357 = vmatpush2.msra.mxu0 0.0
        %358 = vmatprep.subr.mxu0 0.0
        %359 = vmatpush2.msra.mxu0 0.0
        %360 = vmatprep.subr.mxu0 0.0
        %361 = vmatpush2.msra.mxu0 0.0
        %362 = vmatprep.subr.mxu0 0.0
        %363 = vmatpush2.msra.mxu0 0.0
        %364 = vmatprep.subr.mxu0 0.0
        %365 = vmatpush2.msra.mxu0 0.0
        %366 = vmatprep.subr.mxu0 0.0
        %367 = vmatpush2.msra.mxu0 0.0
        %368 = vmatprep.subr.mxu0 0.0
        %369 = vmatpush2.msra.mxu0 0.0
        %370 = vmatprep.subr.mxu0 0.0
        %371 = vmatpush2.msra.mxu0 0.0
        %372 = vmatprep.mubr.f32.mxu0 0.0
        %373 = vmatmul.mubr.f32.gmra.mxu0 %v306
        %v374 = vpop.f32.mrf.mxu0
        %v375 = vadd.f32 0.0, %v374
        %v376 = vpop.f32.mrf.mxu0
        %377 = vdwg.mxu0
        %v378 = vmax.f32 %v375, 0.0
        %v379 = vld [vmem:[%s2] sm:$0xff]
        %v380 = vld [vmem:[%s2 + $0x8] sm:$0xff]
        %v381 = vld [vmem:[%s2 + $0x10] sm:$0xff]
        %v382 = vld [vmem:[%s2 + $0x18] sm:$0xff]
        %vm383 = vcmask 64512
        %v385 = vsel %vm383, %v379, 0
        %v388 = vsel %vm383, %v380, 0
        %v391 = vsel %vm383, %v381, 0
        %v394 = vsel %vm383, %v382, 0
        %396 = vmatprep.subr.mxu0 0.0
        %397 = vmatpush1.msra.mxu0 0.0
        %398 = vmatprep.subr.mxu0 0.0
        %399 = vmatpush1.msra.mxu0 0.0
        %400 = vmatprep.subr.mxu0 0.0
        %401 = vmatpush1.msra.mxu0 0.0
        %402 = vmatprep.subr.mxu0 0.0
        %403 = vmatpush1.msra.mxu0 0.0
        %404 = vmatprep.subr.mxu0 0.0
        %405 = vmatpush1.msra.mxu0 0.0
        %406 = vmatprep.subr.mxu0 0.0
        %407 = vmatpush1.msra.mxu0 0.0
        %408 = vmatprep.subr.mxu0 0.0
        %409 = vmatpush1.msra.mxu0 0.0
        %410 = vmatprep.subr.mxu0 0.0
        %411 = vmatpush1.msra.mxu0 0.0
        %412 = vmatprep.subr.mxu0 0.0
        %413 = vmatpush1.msra.mxu0 0.0
        %414 = vmatprep.subr.mxu0 0.0
        %415 = vmatpush1.msra.mxu0 0.0
        %416 = vmatprep.subr.mxu0 0.0
        %417 = vmatpush1.msra.mxu0 0.0
        %418 = vmatprep.subr.mxu0 0.0
        %419 = vmatpush1.msra.mxu0 0.0
        %420 = vmatprep.subr.mxu0 0.0
        %421 = vmatpush1.msra.mxu0 0.0
        %422 = vmatprep.subr.mxu0 0.0
        %423 = vmatpush1.msra.mxu0 0.0
        %424 = vmatprep.subr.mxu0 0.0
        %425 = vmatpush1.msra.mxu0 0.0
        %426 = vmatprep.subr.mxu0 0.0
        %427 = vmatpush1.msra.mxu0 %v378
        %428 = vmatprep.subr.mxu0 0.0
        %429 = vmatpush2.msra.mxu0 0.0
        %430 = vmatprep.subr.mxu0 0.0
        %431 = vmatpush2.msra.mxu0 0.0
        %432 = vmatprep.subr.mxu0 0.0
        %433 = vmatpush2.msra.mxu0 0.0
        %434 = vmatprep.subr.mxu0 0.0
        %435 = vmatpush2.msra.mxu0 0.0
        %436 = vmatprep.subr.mxu0 0.0
        %437 = vmatpush2.msra.mxu0 0.0
        %438 = vmatprep.subr.mxu0 0.0
        %439 = vmatpush2.msra.mxu0 0.0
        %440 = vmatprep.subr.mxu0 0.0
        %441 = vmatpush2.msra.mxu0 0.0
        %442 = vmatprep.subr.mxu0 0.0
        %443 = vmatpush2.msra.mxu0 0.0
        %444 = vmatprep.subr.mxu0 0.0
        %445 = vmatpush2.msra.mxu0 0.0
        %446 = vmatprep.subr.mxu0 0.0
        %447 = vmatpush2.msra.mxu0 0.0
        %448 = vmatprep.subr.mxu0 0.0
        %449 = vmatpush2.msra.mxu0 0.0
        %450 = vmatprep.subr.mxu0 0.0
        %451 = vmatpush2.msra.mxu0 0.0
        %452 = vmatprep.subr.mxu0 0.0
        %453 = vmatpush2.msra.mxu0 0.0
        %454 = vmatprep.subr.mxu0 0.0
        %455 = vmatpush2.msra.mxu0 0.0
        %456 = vmatprep.subr.mxu0 0.0
        %457 = vmatpush2.msra.mxu0 0.0
        %458 = vmatprep.subr.mxu0 0.0
        %459 = vmatpush2.msra.mxu0 0.0
        %460 = vmatprep.mubr.f32.mxu0 0.0
        %461 = vmatmul.mubr.f32.gmra.mxu0 %v385
        %v462 = vpop.f32.mrf.mxu0
        %v463 = vadd.f32 0.0, %v462
        %v464 = vpop.f32.mrf.mxu0
        %465 = vmatprep.mubr.f32.mxu0 0.0
        %466 = vmatmul.mubr.f32.gmra.mxu0 %v388
        %v467 = vpop.f32.mrf.mxu0
        %v468 = vadd.f32 0.0, %v467
        %v469 = vpop.f32.mrf.mxu0
        %470 = vmatprep.mubr.f32.mxu0 0.0
        %471 = vmatmul.mubr.f32.gmra.mxu0 %v391
        %v472 = vpop.f32.mrf.mxu0
        %v473 = vadd.f32 0.0, %v472
        %v474 = vpop.f32.mrf.mxu0
        %475 = vmatprep.mubr.f32.mxu0 0.0
        %476 = vmatmul.mubr.f32.gmra.mxu0 %v394
        %v477 = vpop.f32.mrf.mxu0
        %v478 = vadd.f32 0.0, %v477
        %v479 = vpop.f32.mrf.mxu0
        %480 = vdwg.mxu0
        %485 = vrot.lane.b32.xlu0 %v463, 127
        %v486 = vpop.permute.xlu0 %485
        %487 = vrot.lane.b32.xlu0 %v468, 127
        %v488 = vpop.permute.xlu0 %487
        %489 = vrot.lane.b32.xlu0 %v473, 127
        %v490 = vpop.permute.xlu0 %489
        %491 = vrot.lane.b32.xlu0 %v478, 127
        %v492 = vpop.permute.xlu0 %491
        %v497 = vadd.f32 %v463, %v486
        %v498 = vadd.f32 %v468, %v488
        %v499 = vadd.f32 %v473, %v490
        %v500 = vadd.f32 %v478, %v492
        %v501 = vxor.u32 %v497, 2147483648
        %v502 = vxor.u32 %v498, 2147483648
        %v503 = vxor.u32 %v499, 2147483648
        %v504 = vxor.u32 %v500, 2147483648
        %v505 = vmul.f32 %v501, 1.442695
        %v506 = vpow.pop %v505
        %v507 = vmul.f32 %v502, 1.442695
        %v508 = vpow.pop %v507
        %v509 = vmul.f32 %v503, 1.442695
        %v510 = vpow.pop %v509
        %v511 = vmul.f32 %v504, 1.442695
        %v512 = vpow.pop %v511
        %v513 = vadd.f32 %v506, 1.0
        %v514 = vadd.f32 %v508, 1.0
        %v515 = vadd.f32 %v510, 1.0
        %v516 = vadd.f32 %v512, 1.0
        %v517 = vrcp.pop %v513
        %v518 = vmul.f32 1.0, %v517
        %v519 = vrcp.pop %v514
        %v520 = vmul.f32 1.0, %v519
        %v521 = vrcp.pop %v515
        %v522 = vmul.f32 1.0, %v521
        %v523 = vrcp.pop %v516
        %v524 = vmul.f32 1.0, %v523
        %526 = vset.pattern.permute.xlu0 0
        %527 = vperm.xlu0 %526, %v518
        %v528 = vpop.permute.xlu0 %527
        %531 = vset.pattern.permute.xlu0 0
        %532 = vperm.xlu0 %531, %v520
        %v533 = vpop.permute.xlu0 %532
        %536 = vset.pattern.permute.xlu0 0
        %537 = vperm.xlu0 %536, %v522
        %v538 = vpop.permute.xlu0 %537
        %541 = vset.pattern.permute.xlu0 0
        %542 = vperm.xlu0 %541, %v524
        %v543 = vpop.permute.xlu0 %542
        %v545 = vmul.f32 %v189, %v528
        %v546 = vmul.f32 %v190, %v528
        %v547 = vmul.f32 %v191, %v533
        %v548 = vmul.f32 %v192, %v533
        %v549 = vmul.f32 %v193, %v538
        %v550 = vmul.f32 %v194, %v538
        %v551 = vmul.f32 %v195, %v543
        %v552 = vmul.f32 %v196, %v543
        %553 = vst [vmem:[%s188] sm:$0xff] %v545
        %554 = vst [vmem:[%s188 + $0x8] sm:$0xff] %v546
        %555 = vst [vmem:[%s188 + $0x10] sm:$0xff] %v547
        %556 = vst [vmem:[%s188 + $0x18] sm:$0xff] %v548
        %557 = vst [vmem:[%s188 + $0x20] sm:$0xff] %v549
        %558 = vst [vmem:[%s188 + $0x28] sm:$0xff] %v550
        %559 = vst [vmem:[%s188 + $0x30] sm:$0xff] %v551
        %560 = vst [vmem:[%s188 + $0x38] sm:$0xff] %v552
        %s561 = sand.u32 %s96, 1
        %s562 = scalar_lea.sflag [#allocation4], %s561
        %s563 = sand.u32 %s96, 1
        %s564 = smul.addr %s563, 64
        %s565 = scalar_lea.vmem [#allocation5], %s564
        // Predicated region
        $region37: #{tpu_custom_call.1} parent=31 // pred_check
          %p566 = pneg %p106
        $region38: #{tpu_custom_call.1} parent=31 // pred_check_branch
          %568 = sbr.rel (%p566) target = $region40
        $region39: #{tpu_custom_call.1} parent=31 // pred_region
          %s570 = ssub.s32 1024, 1024
          %571 = vsyncadd %s562, %s570
          %s572 = smul.addr %s20, 8
          %s573 = smul.addr %s572, 128
          %s574 = scalar_lea.hbm %s3, %s573
          %s575 = sshll.u32 %s565, 4
          %s576 = int_to_ptr.vmem [resolvable:$true] %s575
          %581 = dma.vmem_to_hbm [thread:$0]  %s576, 1024, %s574, %s562, 256, 256, 16
        $region40: #{tpu_custom_call.1} parent=31 // pred_fallthru
          _
      $region32: #{tpu_custom_call.1} parent=5 // pred_fallthru
        _
      %p582 = scmp.le.s32.totalorder 2, %s15
      // Predicated region
      $region41: #{tpu_custom_call.1} parent=5 // pred_check
        %p583 = pneg %p582
      $region42: #{tpu_custom_call.1} parent=5 // pred_check_branch
        %585 = sbr.rel (%p583) target = $region44
      $region43: #{tpu_custom_call.1} parent=5 // pred_region
        %s586 = ssub.s32 %s15, 2
        // Predicated region
        $region45: #{tpu_custom_call.1} parent=43 // pred_check
          %p587 = pneg %p112
        $region46: #{tpu_custom_call.1} parent=43 // pred_check_branch
          %589 = sbr.rel (%p587) target = $region48
        $region47: #{tpu_custom_call.1} parent=43 // pred_region
          %s590 = sand.u32 %s97, 1
          %s591 = scalar_lea.sflag [#allocation4], %s590
          %s592 = sand.u32 %s97, 1
          %s593 = smul.addr %s592, 64
          %s594 = scalar_lea.vmem [#allocation5], %s593
          %595 = dma.done %s591, 1024
        $region48: #{tpu_custom_call.1} parent=43 // pred_fallthru
          _
      $region44: #{tpu_custom_call.1} parent=5 // pred_fallthru
        _
    $region6: #{tpu_custom_call.1} parent=1 // loop_footer
      %s19 = sadd.s32 1, %s15
    $region7: #{tpu_custom_call.1} parent=1 // loop_footer_branch
      %14 = sbr.rel target = $region3
    $region8: #{tpu_custom_call.1} parent=1 // loop_exit
      _
    %596 = vsyncpa [#allocation3], 1
    %s597 = scalar_lea.sflag [#allocation3], 1
    %598 = vsyncpa %s597, 1
    %599 = vsyncpa [#allocation4], 1
    %s600 = scalar_lea.sflag [#allocation4], 1
    %601 = vsyncpa %s600, 1

</llo_original>
